<compile_context>
chip_gen: v6e
topology: v6e:2x2x1
jax: 0.10.0
libtpu: 0.0.40
codegen_flags: <defaults>
</compile_context>

<pallas_src>
import functools
import math

import jax
import jax.numpy as jnp
import numpy as np
from jax.experimental import pallas as pl
from jax.experimental.pallas import tpu as pltpu


# ----------------------- Kernel A: RMSNorm + QKV + RoPE ----------------------

def qkv_rope_kernel(x_ref, cos_ref, sin_ref, w_in_ref, wqkv_ref,
                    q_ref, k_ref, v_ref,
                    *, num_heads, num_kv_heads, head_dim, eps):
    f32 = jnp.float32
    bf16 = jnp.bfloat16

    x = x_ref[0]                               # [TS, H] f32
    ts = x.shape[0]
    half = head_dim // 2
    q_dim = num_heads * head_dim
    kv_dim = num_kv_heads * head_dim

    # RMSNorm (f32 vector math; v5e has no bf16 VPU/EUP).
    var = jnp.mean(x * x, axis=-1, keepdims=True)
    xn = x * jax.lax.rsqrt(var + eps) * (1.0 + w_in_ref[...])   # (1,H) broadcast

    # Fused QKV projection: one [TS,H]@[H,(nH+2nKV)*hd] MXU pass, bf16 in, f32 acc.
    # 1/sqrt(head_dim) is already folded into the Q columns (wrapper).
    qkv = jnp.dot(xn.astype(bf16), wqkv_ref[...], preferred_element_type=f32)

    # Split + head-major layout (done once per token, not per kv tile).
    q = jnp.transpose(qkv[:, :q_dim].reshape(ts, num_heads, head_dim), (1, 0, 2))
    k = jnp.transpose(
        qkv[:, q_dim:q_dim + kv_dim].reshape(ts, num_kv_heads, head_dim), (1, 0, 2))
    v = jnp.transpose(
        qkv[:, q_dim + kv_dim:].reshape(ts, num_kv_heads, head_dim), (1, 0, 2))

    # RoPE: rotate_half(t) == roll(t, hd/2) * ([-1]*half ++ [+1]*half).
    # Broadcasts hoisted once (JAX does not CSE broadcast_in_dim).
    lane = jax.lax.broadcasted_iota(jnp.int32, (1, 1, head_dim), 2)
    sign = jnp.where(lane < half, -1.0, 1.0).astype(f32)
    cos_b = cos_ref[...][None]                 # [1, TS, hd]
    sin_signed = sign * sin_ref[...][None]     # [1, TS, hd]

    def rope(t):
        return t * cos_b + pltpu.roll(t, half, 2) * sin_signed

    q_ref[0] = rope(q).astype(q_ref.dtype)
    k_ref[0] = rope(k).astype(k_ref.dtype)
    v_ref[0] = v.astype(v_ref.dtype)


# ------------- Kernel B: flash attention + out-proj + residual ---------------

def attn_kernel(q_ref, k_ref, v_ref, x_ref, wo_ref, h1_ref,
                m_sc, l_sc, acc_sc,
                *, num_heads, num_kv_heads, head_dim, q_tile, k_tile):
    f32 = jnp.float32
    bf16 = jnp.bfloat16
    n_rep = num_heads // num_kv_heads
    tq, tk = q_tile, k_tile

    qi = pl.program_id(1)
    ki = pl.program_id(2)
    n_kv = pl.num_programs(2)

    @pl.when(ki == 0)
    def _():
        m_sc[...] = jnp.full(m_sc.shape, -jnp.inf, f32)
        l_sc[...] = jnp.zeros(l_sc.shape, f32)
        acc_sc[...] = jnp.zeros(acc_sc.shape, f32)

    # Skip kv tiles lying entirely above the causal diagonal.
    @pl.when(ki * tk <= qi * tq + (tq - 1))
    def _():
        # GQA without repeating K/V: group query heads per KV head.
        q = q_ref[0].reshape(num_kv_heads, n_rep * tq, head_dim)     # bf16
        k = k_ref[0]                                                 # [nKV, tk, hd] bf16
        v = v_ref[0]

        s = jnp.einsum('gqd,gkd->gqk', q, k,
                       preferred_element_type=f32)                   # [nKV, n_rep*tq, tk]

        # Causal mask from absolute positions (no [B,S,S] HBM mask input).
        q_pos = qi * tq + jax.lax.broadcasted_iota(
            jnp.int32, (n_rep, tq, tk), 1).reshape(n_rep * tq, tk)
        k_pos = ki * tk + jax.lax.broadcasted_iota(
            jnp.int32, (n_rep * tq, tk), 1)
        s = s + jnp.where(k_pos <= q_pos, 0.0, -1e9).astype(f32)[None]

        m_prev = m_sc[...]
        m_new = jnp.maximum(m_prev, jnp.max(s, axis=-1, keepdims=True))
        alpha = jnp.exp(m_prev - m_new)
        p = jnp.exp(s - m_new)
        l_sc[...] = alpha * l_sc[...] + jnp.sum(p, axis=-1, keepdims=True)
        acc_sc[...] = alpha * acc_sc[...] + jnp.einsum(
            'gqk,gkd->gqd', p.astype(bf16), v, preferred_element_type=f32)
        m_sc[...] = m_new

    @pl.when(ki == n_kv - 1)
    def _():
        o = acc_sc[...] * pl.reciprocal(l_sc[...], approx=True)      # [nKV, n_rep*tq, hd]
        # Lane-dense [tq, nH*hd] layout -> single out-projection matmul
        # (head contraction folded into the MXU accumulator, no per-head sum).
        o = o.reshape(num_heads, tq, head_dim)
        o = jnp.transpose(o, (1, 0, 2)).reshape(tq, num_heads * head_dim)
        attn_out = jnp.dot(o.astype(bf16), wo_ref[...], preferred_element_type=f32)
        h1_ref[0] = x_ref[0] + attn_out                              # first residual


# --------- Kernel C: post-norm + intermediate-blocked MLP + residual ---------

def mlp_kernel(h1_ref, w_post_ref, wgu_ref, wd_ref, out_ref,
               acc_sc, xn_sc, *, eps, i_tile):
    f32 = jnp.float32
    j = pl.program_id(2)
    n_i = pl.num_programs(2)

    @pl.when(j == 0)
    def _():
        h1 = h1_ref[0]                                  # [TS, H] f32
        var = jnp.mean(h1 * h1, axis=-1, keepdims=True)
        xn = h1 * jax.lax.rsqrt(var + eps) * (1.0 + w_post_ref[...])
        xn_sc[...] = xn.astype(xn_sc.dtype)             # bf16 matmul operand
        acc_sc[...] = h1                                # second residual seeded into acc

    # gate/up fused: one matmul against the interleaved [H, 2*TI] weight block.
    gu = jnp.dot(xn_sc[...], wgu_ref[...], preferred_element_type=f32)   # [TS, 2*TI]
    gate = gu[:, :i_tile]
    up = gu[:, i_tile:]
    act = (jax.nn.gelu(gate, approximate=True) * up).astype(jnp.bfloat16)
    acc_sc[...] += jnp.dot(act, wd_ref[...], preferred_element_type=f32)

    @pl.when(j == n_i - 1)
    def _():
        out_ref[0] = acc_sc[...]


# ------------------------------- weight prep ----------------------------------

def prepare_params(params, *, num_heads, num_kv_heads, head_dim, i_tile):
    """One-time weight prep (do at weight-load time, NOT per forward call)."""
    del num_kv_heads  # layout is implied by the concatenated shapes
    H = params['wq'].shape[0]
    inter = params['wg'].shape[1]
    n_i = inter // i_tile
    scale = 1.0 / math.sqrt(head_dim)
    # Fused QKV weight; attention scale folded into the Q columns.
    wqkv = jnp.concatenate(
        [params['wq'] * scale, params['wk'], params['wv']], axis=1
    ).astype(jnp.bfloat16)
    # Interleave gate/up per intermediate tile so each (H, 2*i_tile) block holds
    # the matching gate and up columns for the blocked MLP kernel.
    wgu = jnp.concatenate(
        [params['wg'].reshape(H, n_i, i_tile),
         params['wu'].reshape(H, n_i, i_tile)], axis=2
    ).reshape(H, 2 * inter).astype(jnp.bfloat16)
    return dict(
        wqkv=wqkv,
        wo=params['wo'].astype(jnp.bfloat16),
        wgu=wgu,
        wd=params['wd'].astype(jnp.bfloat16),
        w_in=params['w_in'].astype(jnp.float32),
        w_post=params['w_post'].astype(jnp.float32),
    )


# --------------------------------- wrapper ------------------------------------

def gemma_decoder_layer(x, cos, sin, prep, *, num_heads, num_kv_heads, head_dim,
                        eps, seq_tile=8, q_tile=8, k_tile=8, i_tile=64,
                        vmem_limit_bytes=64 * 1024 * 1024):
    B, S, H = x.shape
    nH, nKV, hd = num_heads, num_kv_heads, head_dim
    n_rep = nH // nKV
    inter = prep['wgu'].shape[1] // 2

    assert nH % nKV == 0 and hd % 2 == 0
    assert S % seq_tile == 0 and S % q_tile == 0 and S % k_tile == 0
    assert inter % i_tile == 0

    qkv_out = (nH + 2 * nKV) * hd

    def cp(sem):
        return pltpu.CompilerParams(dimension_semantics=sem,
                                    vmem_limit_bytes=vmem_limit_bytes)

    # ---- A: RMSNorm + fused QKV + RoPE -> head-major bf16 q/k/v -------------
    qkv_fn = functools.partial(
        qkv_rope_kernel, num_heads=nH, num_kv_heads=nKV, head_dim=hd, eps=eps)
    q, k, v = pl.pallas_call(
        qkv_fn,
        out_shape=(
            jax.ShapeDtypeStruct((B, nH, S, hd), jnp.bfloat16),
            jax.ShapeDtypeStruct((B, nKV, S, hd), jnp.bfloat16),
            jax.ShapeDtypeStruct((B, nKV, S, hd), jnp.bfloat16),
        ),
        grid=(B, S // seq_tile),
        in_specs=[
            pl.BlockSpec((1, seq_tile, H), lambda b, s: (b, s, 0)),
            pl.BlockSpec((seq_tile, hd), lambda b, s: (s, 0)),
            pl.BlockSpec((seq_tile, hd), lambda b, s: (s, 0)),
            pl.BlockSpec((1, H), lambda b, s: (0, 0)),
            pl.BlockSpec((H, qkv_out), lambda b, s: (0, 0)),
        ],
        out_specs=(
            pl.BlockSpec((1, nH, seq_tile, hd), lambda b, s: (b, 0, s, 0)),
            pl.BlockSpec((1, nKV, seq_tile, hd), lambda b, s: (b, 0, s, 0)),
            pl.BlockSpec((1, nKV, seq_tile, hd), lambda b, s: (b, 0, s, 0)),
        ),
        compiler_params=cp(("parallel", "parallel")),
    )(x, cos, sin, prep['w_in'], prep['wqkv'])

    # ---- B: flash attention + out-proj + first residual ---------------------
    attn_fn = functools.partial(
        attn_kernel, num_heads=nH, num_kv_heads=nKV, head_dim=hd,
        q_tile=q_tile, k_tile=k_tile)
    h1 = pl.pallas_call(
        attn_fn,
        out_shape=jax.ShapeDtypeStruct((B, S, H), jnp.float32),
        grid=(B, S // q_tile, S // k_tile),
        in_specs=[
            pl.BlockSpec((1, nH, q_tile, hd), lambda b, qi, ki: (b, 0, qi, 0)),
            pl.BlockSpec((1, nKV, k_tile, hd), lambda b, qi, ki: (b, 0, ki, 0)),
            pl.BlockSpec((1, nKV, k_tile, hd), lambda b, qi, ki: (b, 0, ki, 0)),
            pl.BlockSpec((1, q_tile, H), lambda b, qi, ki: (b, qi, 0)),
            pl.BlockSpec((nH * hd, H), lambda b, qi, ki: (0, 0)),
        ],
        out_specs=pl.BlockSpec((1, q_tile, H), lambda b, qi, ki: (b, qi, 0)),
        scratch_shapes=[
            pltpu.VMEM((nKV, n_rep * q_tile, 1), jnp.float32),
            pltpu.VMEM((nKV, n_rep * q_tile, 1), jnp.float32),
            pltpu.VMEM((nKV, n_rep * q_tile, hd), jnp.float32),
        ],
        compiler_params=cp(("parallel", "parallel", "arbitrary")),
    )(q, k, v, x, prep['wo'])

    # ---- C: post-norm + intermediate-blocked MLP + second residual ----------
    mlp_fn = functools.partial(mlp_kernel, eps=eps, i_tile=i_tile)
    out = pl.pallas_call(
        mlp_fn,
        out_shape=jax.ShapeDtypeStruct((B, S, H), jnp.float32),
        grid=(B, S // seq_tile, inter // i_tile),
        in_specs=[
            pl.BlockSpec((1, seq_tile, H), lambda b, s, j: (b, s, 0)),
            pl.BlockSpec((1, H), lambda b, s, j: (0, 0)),
            pl.BlockSpec((H, 2 * i_tile), lambda b, s, j: (0, j)),
            pl.BlockSpec((i_tile, H), lambda b, s, j: (j, 0)),
        ],
        out_specs=pl.BlockSpec((1, seq_tile, H), lambda b, s, j: (b, s, 0)),
        scratch_shapes=[
            pltpu.VMEM((seq_tile, H), jnp.float32),
            pltpu.VMEM((seq_tile, H), jnp.bfloat16),
        ],
        compiler_params=cp(("parallel", "parallel", "arbitrary")),
    )(h1, prep['w_post'], prep['wgu'], prep['wd'])

    return out


# --------------------------- pure-JAX reference (f32) -------------------------

def ref_decoder_layer(x, cos, sin, params, *, num_heads, num_kv_heads,
                      head_dim, eps):
    B, S, H = x.shape
    n_rep = num_heads // num_kv_heads

    def rmsnorm(h, w):
        var = jnp.mean(h * h, axis=-1, keepdims=True)
        return h * jax.lax.rsqrt(var + eps) * (1.0 + w)

    def rot_half(t):
        half = t.shape[-1] // 2
        return jnp.concatenate([-t[..., half:], t[..., :half]], axis=-1)

    xn = rmsnorm(x, params['w_in'][0])
    q = xn @ params['wq']
    k = xn @ params['wk']
    v = xn @ params['wv']
    q = q.reshape(B, S, num_heads, head_dim).transpose(0, 2, 1, 3)
    k = k.reshape(B, S, num_kv_heads, head_dim).transpose(0, 2, 1, 3)
    v = v.reshape(B, S, num_kv_heads, head_dim).transpose(0, 2, 1, 3)
    c = cos[None, None]
    s = sin[None, None]
    q = q * c + rot_half(q) * s
    k = k * c + rot_half(k) * s
    k = jnp.repeat(k, n_rep, axis=1)
    v = jnp.repeat(v, n_rep, axis=1)
    scores = jnp.einsum('bhqd,bhkd->bhqk', q, k) / math.sqrt(head_dim)
    causal = jnp.tril(jnp.ones((S, S), dtype=bool))
    scores = scores + jnp.where(causal, 0.0, -1e9)
    probs = jax.nn.softmax(scores, axis=-1)
    attn = jnp.einsum('bhqk,bhkd->bhqd', probs, v)
    attn = attn.transpose(0, 2, 1, 3).reshape(B, S, num_heads * head_dim)
    attn = attn @ params['wo']
    h1 = x + attn
    h1n = rmsnorm(h1, params['w_post'][0])
    mlp = (jax.nn.gelu(h1n @ params['wg'], approximate=True)
           * (h1n @ params['wu'])) @ params['wd']
    return h1 + mlp


# ----------------------------------- main --------------------------------------

if __name__ == "__main__":
    B, S, H = 2, 16, 32
    num_heads, num_kv_heads, head_dim = 4, 2, 128
    intermediate = 128
    eps = 1e-6
    rope_theta = 10000.0
    i_tile = 64

    key = jax.random.PRNGKey(0)
    ks = jax.random.split(key, 10)

    def winit(k, shape, scale=0.02):
        return (scale * jax.random.normal(k, shape)).astype(jnp.float32)

    params = {
        'w_in':   winit(ks[0], (1, H), 0.1),
        'w_post': winit(ks[1], (1, H), 0.1),
        'wq': winit(ks[2], (H, num_heads * head_dim)),
        'wk': winit(ks[3], (H, num_kv_heads * head_dim)),
        'wv': winit(ks[4], (H, num_kv_heads * head_dim)),
        'wo': winit(ks[5], (num_heads * head_dim, H)),
        'wg': winit(ks[6], (H, intermediate)),
        'wu': winit(ks[7], (H, intermediate)),
        'wd': winit(ks[8], (intermediate, H)),
    }
    x = jax.random.normal(ks[9], (B, S, H), dtype=jnp.float32)

    # Rotary tables (GemmaRotaryEmbedding); position_ids = arange(S), identical
    # across batch -> pass batch-invariant [S, head_dim].
    positions = jnp.arange(S, dtype=jnp.float32)
    inv_freq = 1.0 / (rope_theta ** (
        jnp.arange(0, head_dim, 2, dtype=jnp.float32) / head_dim))
    freqs = positions[:, None] * inv_freq[None, :]          # [S, hd/2]
    emb = jnp.concatenate([freqs, freqs], axis=-1)           # [S, hd]
    cos = jnp.cos(emb).astype(jnp.float32)
    sin = jnp.sin(emb).astype(jnp.float32)

    # One-time weight prep (out of the forward path per the perf review).
    prep = prepare_params(params, num_heads=num_heads, num_kv_heads=num_kv_heads,
                          head_dim=head_dim, i_tile=i_tile)

    out = gemma_decoder_layer(
        x, cos, sin, prep,
        num_heads=num_heads, num_kv_heads=num_kv_heads, head_dim=head_dim,
        eps=eps, seq_tile=8, q_tile=8, k_tile=8, i_tile=i_tile)
    out = jax.block_until_ready(out)

    ref = ref_decoder_layer(
        x, cos, sin, params,
        num_heads=num_heads, num_kv_heads=num_kv_heads, head_dim=head_dim, eps=eps)
    ref = jax.block_until_ready(ref)

    # bf16 matmul operands / bf16 q,k,v storage + approx reciprocal -> loosened
    # tolerance vs the f32 reference.
    np.testing.assert_allclose(np.asarray(out), np.asarray(ref),
                               rtol=2e-2, atol=2e-2)
    print("KERNEL_OK")
</pallas_src>

<mosaic_0001>
module attributes {stable_mosaic.version = 11 : i64} {
  func.func @qkv_rope_kernel(%arg0: i32, %arg1: i32, %arg2: memref<1x8x32xf32, #tpu.memory_space<vmem>>, %arg3: memref<8x128xf32, #tpu.memory_space<vmem>>, %arg4: memref<8x128xf32, #tpu.memory_space<vmem>>, %arg5: memref<1x32xf32, #tpu.memory_space<vmem>>, %arg6: memref<32x1024xbf16, #tpu.memory_space<vmem>>, %arg7: memref<1x4x8x128xbf16, #tpu.memory_space<vmem>>, %arg8: memref<1x2x8x128xbf16, #tpu.memory_space<vmem>>, %arg9: memref<1x2x8x128xbf16, #tpu.memory_space<vmem>>) attributes {dimension_semantics = [#tpu.dimension_semantics<parallel>, #tpu.dimension_semantics<parallel>], iteration_bounds = array<i64: 2, 2>, scalar_prefetch = 0 : i64, scratch_operands = 0 : i64, tpu.core_type = #tpu.core_type<tc>, window_params = [{transform_indices = @transform_0, window_bounds = array<i64: 1, 8, 32>}, {transform_indices = @transform_1, window_bounds = array<i64: 8, 128>}, {transform_indices = @transform_2, window_bounds = array<i64: 8, 128>}, {pipeline_mode = #tpu.pipeline_mode<synchronous>, transform_indices = @transform_3, window_bounds = array<i64: 1, 32>}, {pipeline_mode = #tpu.pipeline_mode<synchronous>, transform_indices = @transform_4, window_bounds = array<i64: 32, 1024>}, {transform_indices = @transform_5, window_bounds = array<i64: 1, 4, 8, 128>}, {transform_indices = @transform_6, window_bounds = array<i64: 1, 2, 8, 128>}, {transform_indices = @transform_7, window_bounds = array<i64: 1, 2, 8, 128>}]} {
    %c0 = arith.constant 0 : index
    %c0_0 = arith.constant 0 : index
    %c0_1 = arith.constant 0 : index
    %0 = vector.load %arg2[%c0, %c0_0, %c0_1] : memref<1x8x32xf32, #tpu.memory_space<vmem>>, vector<1x8x32xf32>
    %1 = vector.shape_cast %0 : vector<1x8x32xf32> to vector<8x32xf32>
    %2 = arith.mulf %1, %1 : vector<8x32xf32>
    %cst = arith.constant dense<0.000000e+00> : vector<8xf32>
    %3 = vector.multi_reduction <add>, %2, %cst [1] : vector<8x32xf32> to vector<8xf32>
    %4 = vector.shape_cast %3 : vector<8xf32> to vector<8x1xf32>
    %cst_2 = arith.constant 3.200000e+01 : f32
    %5 = vector.broadcast %cst_2 : f32 to vector<8x1xf32>
    %6 = arith.divf %4, %5 : vector<8x1xf32>
    %cst_3 = arith.constant 9.99999997E-7 : f32
    %7 = vector.broadcast %cst_3 : f32 to vector<8x1xf32>
    %8 = arith.addf %6, %7 : vector<8x1xf32>
    %9 = math.rsqrt %8 : vector<8x1xf32>
    %10 = vector.broadcast %9 : vector<8x1xf32> to vector<8x32xf32>
    %11 = arith.mulf %1, %10 : vector<8x32xf32>
    %c0_4 = arith.constant 0 : index
    %c0_5 = arith.constant 0 : index
    %12 = vector.load %arg5[%c0_4, %c0_5] : memref<1x32xf32, #tpu.memory_space<vmem>>, vector<1x32xf32>
    %cst_6 = arith.constant 1.000000e+00 : f32
    %13 = vector.broadcast %cst_6 : f32 to vector<1x32xf32>
    %14 = arith.addf %13, %12 : vector<1x32xf32>
    %15 = vector.broadcast %14 : vector<1x32xf32> to vector<8x32xf32>
    %16 = arith.mulf %11, %15 : vector<8x32xf32>
    %17 = arith.truncf %16 : vector<8x32xf32> to vector<8x32xbf16>
    %c0_7 = arith.constant 0 : index
    %c0_8 = arith.constant 0 : index
    %18 = vector.load %arg6[%c0_7, %c0_8] : memref<32x1024xbf16, #tpu.memory_space<vmem>>, vector<32x1024xbf16>
    %cst_9 = arith.constant dense<0.000000e+00> : vector<8x1024xf32>
    %19 = tpu.matmul %17, %18, %cst_9 {dimension_numbers = #tpu.dot_dimension_numbers<[1], [0], [0], [1], [0, 0, 1, 1], [], []>} : vector<8x32xbf16>, vector<32x1024xbf16>, vector<8x1024xf32> -> vector<8x1024xf32>
    %20 = vector.extract_strided_slice %19 {offsets = [0, 0], sizes = [8, 512], strides = [1, 1]} : vector<8x1024xf32> to vector<8x512xf32>
    %21 = vector.shape_cast %20 : vector<8x512xf32> to vector<8x4x128xf32>
    %22 = tpu.transpose %21, [1, 0, 2] : vector<8x4x128xf32> -> vector<4x8x128xf32>
    %23 = vector.extract_strided_slice %19 {offsets = [0, 512], sizes = [8, 256], strides = [1, 1]} : vector<8x1024xf32> to vector<8x256xf32>
    %24 = vector.shape_cast %23 : vector<8x256xf32> to vector<8x2x128xf32>
    %25 = tpu.transpose %24, [1, 0, 2] : vector<8x2x128xf32> -> vector<2x8x128xf32>
    %26 = vector.extract_strided_slice %19 {offsets = [0, 768], sizes = [8, 256], strides = [1, 1]} : vector<8x1024xf32> to vector<8x256xf32>
    %27 = vector.shape_cast %26 : vector<8x256xf32> to vector<8x2x128xf32>
    %28 = tpu.transpose %27, [1, 0, 2] : vector<8x2x128xf32> -> vector<2x8x128xf32>
    %29 = tpu.iota {dimensions = array<i32: 2>} : vector<1x1x128xi32>
    %c64_i32 = arith.constant 64 : i32
    %30 = vector.broadcast %c64_i32 : i32 to vector<1x1x128xi32>
    %31 = arith.cmpi slt, %29, %30 : vector<1x1x128xi32>
    %cst_10 = arith.constant -1.000000e+00 : f32
    %cst_11 = arith.constant 1.000000e+00 : f32
    %32 = vector.broadcast %cst_10 : f32 to vector<1x1x128xf32>
    %33 = vector.broadcast %cst_11 : f32 to vector<1x1x128xf32>
    %34 = arith.select %31, %32, %33 : vector<1x1x128xi1>, vector<1x1x128xf32>
    %c0_12 = arith.constant 0 : index
    %c0_13 = arith.constant 0 : index
    %35 = vector.load %arg3[%c0_12, %c0_13] : memref<8x128xf32, #tpu.memory_space<vmem>>, vector<8x128xf32>
    %36 = vector.shape_cast %35 : vector<8x128xf32> to vector<1x8x128xf32>
    %c0_14 = arith.constant 0 : index
    %c0_15 = arith.constant 0 : index
    %37 = vector.load %arg4[%c0_14, %c0_15] : memref<8x128xf32, #tpu.memory_space<vmem>>, vector<8x128xf32>
    %38 = vector.shape_cast %37 : vector<8x128xf32> to vector<1x8x128xf32>
    %39 = vector.broadcast %34 : vector<1x1x128xf32> to vector<1x8x128xf32>
    %40 = arith.mulf %39, %38 : vector<1x8x128xf32>
    %41 = vector.broadcast %36 : vector<1x8x128xf32> to vector<4x8x128xf32>
    %42 = arith.mulf %22, %41 : vector<4x8x128xf32>
    %c64_i32_16 = arith.constant 64 : i32
    %43 = tpu.dynamic_rotate %22 by %c64_i32_16 dim 2 : vector<4x8x128xf32>, i32 -> vector<4x8x128xf32>
    %44 = vector.broadcast %40 : vector<1x8x128xf32> to vector<4x8x128xf32>
    %45 = arith.mulf %43, %44 : vector<4x8x128xf32>
    %46 = arith.addf %42, %45 : vector<4x8x128xf32>
    %47 = arith.truncf %46 : vector<4x8x128xf32> to vector<4x8x128xbf16>
    %c0_17 = arith.constant 0 : index
    %c0_18 = arith.constant 0 : index
    %c0_19 = arith.constant 0 : index
    %c0_20 = arith.constant 0 : index
    %48 = vector.load %arg7[%c0_17, %c0_18, %c0_19, %c0_20] : memref<1x4x8x128xbf16, #tpu.memory_space<vmem>>, vector<1x4x8x128xbf16>
    %49 = vector.shape_cast %48 : vector<1x4x8x128xbf16> to vector<4x8x128xbf16>
    %50 = vector.shape_cast %47 : vector<4x8x128xbf16> to vector<1x4x8x128xbf16>
    tpu.vector_store %arg7[%c0_17, %c0_18, %c0_19, %c0_20], %50 {strides = array<i32>} : memref<1x4x8x128xbf16, #tpu.memory_space<vmem>>, vector<1x4x8x128xbf16>,
    %51 = vector.broadcast %36 : vector<1x8x128xf32> to vector<2x8x128xf32>
    %52 = arith.mulf %25, %51 : vector<2x8x128xf32>
    %c64_i32_21 = arith.constant 64 : i32
    %53 = tpu.dynamic_rotate %25 by %c64_i32_21 dim 2 : vector<2x8x128xf32>, i32 -> vector<2x8x128xf32>
    %54 = vector.broadcast %40 : vector<1x8x128xf32> to vector<2x8x128xf32>
    %55 = arith.mulf %53, %54 : vector<2x8x128xf32>
    %56 = arith.addf %52, %55 : vector<2x8x128xf32>
    %57 = arith.truncf %56 : vector<2x8x128xf32> to vector<2x8x128xbf16>
    %c0_22 = arith.constant 0 : index
    %c0_23 = arith.constant 0 : index
    %c0_24 = arith.constant 0 : index
    %c0_25 = arith.constant 0 : index
    %58 = vector.load %arg8[%c0_22, %c0_23, %c0_24, %c0_25] : memref<1x2x8x128xbf16, #tpu.memory_space<vmem>>, vector<1x2x8x128xbf16>
    %59 = vector.shape_cast %58 : vector<1x2x8x128xbf16> to vector<2x8x128xbf16>
    %60 = vector.shape_cast %57 : vector<2x8x128xbf16> to vector<1x2x8x128xbf16>
    tpu.vector_store %arg8[%c0_22, %c0_23, %c0_24, %c0_25], %60 {strides = array<i32>} : memref<1x2x8x128xbf16, #tpu.memory_space<vmem>>, vector<1x2x8x128xbf16>,
    %61 = arith.truncf %28 : vector<2x8x128xf32> to vector<2x8x128xbf16>
    %c0_26 = arith.constant 0 : index
    %c0_27 = arith.constant 0 : index
    %c0_28 = arith.constant 0 : index
    %c0_29 = arith.constant 0 : index
    %62 = vector.load %arg9[%c0_26, %c0_27, %c0_28, %c0_29] : memref<1x2x8x128xbf16, #tpu.memory_space<vmem>>, vector<1x2x8x128xbf16>
    %63 = vector.shape_cast %62 : vector<1x2x8x128xbf16> to vector<2x8x128xbf16>
    %64 = vector.shape_cast %61 : vector<2x8x128xbf16> to vector<1x2x8x128xbf16>
    tpu.vector_store %arg9[%c0_26, %c0_27, %c0_28, %c0_29], %64 {strides = array<i32>} : memref<1x2x8x128xbf16, #tpu.memory_space<vmem>>, vector<1x2x8x128xbf16>,
    return
  }
  func.func @transform_0(%arg0: i32, %arg1: i32) -> (i32, i32, i32) {
    %c0_i32 = arith.constant 0 : i32
    %c0_i32_0 = arith.constant 0 : i32
    return %arg0, %arg1, %c0_i32 : i32, i32, i32
  }
  func.func @transform_1(%arg0: i32, %arg1: i32) -> (i32, i32) {
    %c0_i32 = arith.constant 0 : i32
    %c0_i32_0 = arith.constant 0 : i32
    return %arg1, %c0_i32 : i32, i32
  }
  func.func @transform_2(%arg0: i32, %arg1: i32) -> (i32, i32) {
    %c0_i32 = arith.constant 0 : i32
    %c0_i32_0 = arith.constant 0 : i32
    return %arg1, %c0_i32 : i32, i32
  }
  func.func @transform_3(%arg0: i32, %arg1: i32) -> (i32, i32) {
    %c0_i32 = arith.constant 0 : i32
    %c0_i32_0 = arith.constant 0 : i32
    %c0_i32_1 = arith.constant 0 : i32
    return %c0_i32, %c0_i32_0 : i32, i32
  }
  func.func @transform_4(%arg0: i32, %arg1: i32) -> (i32, i32) {
    %c0_i32 = arith.constant 0 : i32
    %c0_i32_0 = arith.constant 0 : i32
    %c0_i32_1 = arith.constant 0 : i32
    return %c0_i32, %c0_i32_0 : i32, i32
  }
  func.func @transform_5(%arg0: i32, %arg1: i32) -> (i32, i32, i32, i32) {
    %c0_i32 = arith.constant 0 : i32
    %c0_i32_0 = arith.constant 0 : i32
    %c0_i32_1 = arith.constant 0 : i32
    return %arg0, %c0_i32, %arg1, %c0_i32_0 : i32, i32, i32, i32
  }
  func.func @transform_6(%arg0: i32, %arg1: i32) -> (i32, i32, i32, i32) {
    %c0_i32 = arith.constant 0 : i32
    %c0_i32_0 = arith.constant 0 : i32
    %c0_i32_1 = arith.constant 0 : i32
    return %arg0, %c0_i32, %arg1, %c0_i32_0 : i32, i32, i32, i32
  }
  func.func @transform_7(%arg0: i32, %arg1: i32) -> (i32, i32, i32, i32) {
    %c0_i32 = arith.constant 0 : i32
    %c0_i32_0 = arith.constant 0 : i32
    %c0_i32_1 = arith.constant 0 : i32
    return %arg0, %c0_i32, %arg1, %c0_i32_0 : i32, i32, i32, i32
  }
}

</mosaic_0001>

<llo_original>
// kernel: tpu_custom_call.1
$region0: #{tpu_custom_call.1}
  #allocation0 [shape = 'u32[]', space=smem, size = 0x4, offset = 0x4, fixed_abs, tag = 'smem constant byte address 0x4 - core index']
  #allocation1 [shape = 'u32[144,128]{1,0:T(1,128)}', space=vmem, size = 0x12000, scoped, tag = 'internal scratch']
  %s0 = inlined_call_operand.hbm [shape: f32[2,16,32], index: 0, kind: input, shape index: {}]
  %s1 = inlined_call_operand.hbm [shape: f32[16,128], index: 1, kind: input, shape index: {}]
  %s2 = inlined_call_operand.hbm [shape: f32[16,128], index: 2, kind: input, shape index: {}]
  %s3 = inlined_call_operand.vmem [shape: f32[1,32], index: 3, kind: input, shape index: {}]
  %s4 = inlined_call_operand.hbm [shape: bf16[32,1024], index: 4, kind: input, shape index: {}]
  %s5 = inlined_call_operand.hbm [shape: bf16[2,4,16,128], index: 5, kind: output, shape index: {0}]
  %s6 = inlined_call_operand.hbm [shape: bf16[2,2,16,128], index: 6, kind: output, shape index: {1}]
  %s7 = inlined_call_operand.hbm [shape: bf16[2,2,16,128], index: 7, kind: output, shape index: {2}]
  %8 = xla_tuple %s5, %s6, %s7
  %s9 = sld [smem:[#allocation0]]
  $region85: #{tpu_custom_call.1} parent=0
    _
  %s11 = ssub.s32 1, %s9
  %s12 = scalar_select 0, %s11, %s9
  $region1: #{tpu_custom_call.1} parent=0
    #allocation2 [shape = 'u8[8192]{0}', space=vmem, size = 0x2000, scoped, tag = 'input window, operand 0']
    #allocation3 [shape = 's32[2]{0}', space=sflag, size = 0x8, scoped, tag = 'scoped memory for tpu_custom_call.1']
    #allocation4 [shape = 's32[2]{0}', space=sflag, size = 0x8, scoped, tag = 'scoped memory for tpu_custom_call.1']
    #allocation5 [shape = 'u8[8192]{0}', space=vmem, size = 0x2000, scoped, tag = 'input window, operand 1']
    #allocation6 [shape = 's32[2]{0}', space=sflag, size = 0x8, scoped, tag = 'scoped memory for tpu_custom_call.1']
    #allocation7 [shape = 'u8[8192]{0}', space=vmem, size = 0x2000, scoped, tag = 'input window, operand 2']
    #allocation8 [shape = 'u8[65536]{0}', space=vmem, size = 0x10000, scoped, tag = 'input window, operand 4, single buffered']
    #allocation9 [shape = 's32[1]{0}', space=sflag, size = 0x4, scoped, tag = 'scoped memory for tpu_custom_call.1']
    #allocation10 [shape = 'u8[16384]{0}', space=vmem, size = 0x4000, scoped, tag = 'output window, operand 0']
    #allocation11 [shape = 'u8[8192]{0}', space=vmem, size = 0x2000, scoped, tag = 'output window, operand 1']
    #allocation12 [shape = 's32[2]{0}', space=sflag, size = 0x8, scoped, tag = 'scoped memory for tpu_custom_call.1']
    #allocation13 [shape = 'u8[8192]{0}', space=vmem, size = 0x2000, scoped, tag = 'output window, operand 2']
    %13 = vsyncpa [#allocation3], 0
    %s14 = scalar_lea.sflag [#allocation3], 1
    %15 = vsyncpa %s14, 0
    %16 = vsyncpa [#allocation6], 0
    %s17 = scalar_lea.sflag [#allocation6], 1
    %18 = vsyncpa %s17, 0
    %19 = vsyncpa [#allocation9], 0
    %20 = vsyncpa [#allocation4], 0
    %s21 = scalar_lea.sflag [#allocation4], 1
    %22 = vsyncpa %s21, 0
    %23 = vsyncpa [#allocation12], 0
    %s24 = scalar_lea.sflag [#allocation12], 1
    %25 = vsyncpa %s24, 0
    loop: start=0, step=1, limit=6
    $region2: #{tpu_custom_call.1} parent=1 // loop_pre_header
      _
    $region3: #{tpu_custom_call.1} parent=1 // loop_header
      %s27 = sphi 0, %s31
      %p28 = scmp.ge.s32.totalorder %s27, 6
      %s34 = sphi 0, %s46
      %s35 = sphi 0, %s42
      %s36 = sphi 0, %s34
      %s37 = sphi 0, %s35
      %s38 = sphi 0, %s36
      %s39 = sphi 0, %s37
      %s51 = sphi 0, %s53
      %s54 = sphi 0, %s51
      %s55 = sphi 0, %s54
      %s71 = sphi 0, %s55
      %s77 = sphi 0, %s79
      %s80 = sphi 0, %s77
      %s81 = sphi 0, %s80
      %s97 = sphi 0, %s81
      %s103 = sphi 0, %s105
      %s106 = sphi 0, %s103
      %s107 = sphi 0, %s106
      %s123 = sphi 0, %s107
      %s127 = sphi 0, %s127
      %s129 = sphi 0, %s127
      %s130 = sphi 0, %s129
      %s144 = sphi 0, %s130
      %s148 = sphi 0, %s148
      %s150 = sphi 0, %s148
      %s151 = sphi 0, %s150
      %s165 = sphi 0, %s151
      %s173 = sphi 0, %s175
      %s176 = sphi 0, %s173
      %s177 = sphi 0, %s176
      %s193 = sphi 0, %s177
      %s201 = sphi 0, %s203
      %s204 = sphi 0, %s201
      %s205 = sphi 0, %s204
      %s221 = sphi 0, %s205
      %s229 = sphi 0, %s231
      %s232 = sphi 0, %s229
      %s233 = sphi 0, %s232
      %s249 = sphi 0, %s233
    $region4: #{tpu_custom_call.1} parent=1 // loop_header_branch
      %30 = sbr.rel (%p28) target = $region8
    $region5: #{tpu_custom_call.1} parent=1 // loop_body
      %s32 = ssub.s32 %s27, 1
      %s33 = ssub.s32 %s27, 2
      %s40 = sadd.s32 1, %s35
      %p41 = scmp.ge.s32.totalorder %s40, 2
      %s42 = scalar_select %p41, 0, %s40
      %s43 = sadd.s32 1, %s34
      %s44 = scalar_select %p41, %s43, %s34
      %p45 = scmp.ge.s32.totalorder %s44, 2
      %s46 = scalar_select %p45, 0, %s44
      %s47 = ssub.s32 %s34, %s46
      %s48 = ssub.s32 %s35, %s42
      %s49 = sor.u32 %s47, %s48
      %p50 = scmp.eq.s32.totalorder %s49, 0
      %s52 = sadd.s32 %s51, 1
      %s53 = scalar_select %p50, %s51, %s52
      %p56 = pneg %p50
      %p57 = scmp.eq.s32.totalorder %s27, 3
      %p58 = por %p56, %p57
      %p59 = scmp.ne.s32.totalorder %s51, %s54
      %p60 = scmp.eq.s32.totalorder %s27, 0
      %p61 = por %p59, %p60
      %p62 = scmp.ne.s32.totalorder %s51, %s54
      %p63 = scmp.eq.s32.totalorder %s32, 3
      %p64 = por %p62, %p63
      %p65 = scmp.ne.s32.totalorder %s54, %s55
      %p66 = scmp.eq.s32.totalorder %s32, 0
      %p67 = por %p65, %p66
      %p68 = scmp.ne.s32.totalorder %s54, %s55
      %p69 = scmp.eq.s32.totalorder %s33, 3
      %p70 = por %p68, %p69
      %p72 = scmp.ne.s32.totalorder %s55, %s71
      %p73 = scmp.eq.s32.totalorder %s33, 0
      %p74 = por %p72, %p73
      %s75 = ssub.s32 %s35, %s42
      %p76 = scmp.eq.s32.totalorder %s75, 0
      %s78 = sadd.s32 %s77, 1
      %s79 = scalar_select %p76, %s77, %s78
      %p82 = pneg %p76
      %p83 = scmp.eq.s32.totalorder %s27, 3
      %p84 = por %p82, %p83
      %p85 = scmp.ne.s32.totalorder %s77, %s80
      %p86 = scmp.eq.s32.totalorder %s27, 0
      %p87 = por %p85, %p86
      %p88 = scmp.ne.s32.totalorder %s77, %s80
      %p89 = scmp.eq.s32.totalorder %s32, 3
      %p90 = por %p88, %p89
      %p91 = scmp.ne.s32.totalorder %s80, %s81
      %p92 = scmp.eq.s32.totalorder %s32, 0
      %p93 = por %p91, %p92
      %p94 = scmp.ne.s32.totalorder %s80, %s81
      %p95 = scmp.eq.s32.totalorder %s33, 3
      %p96 = por %p94, %p95
      %p98 = scmp.ne.s32.totalorder %s81, %s97
      %p99 = scmp.eq.s32.totalorder %s33, 0
      %p100 = por %p98, %p99
      %s101 = ssub.s32 %s35, %s42
      %p102 = scmp.eq.s32.totalorder %s101, 0
      %s104 = sadd.s32 %s103, 1
      %s105 = scalar_select %p102, %s103, %s104
      %p108 = pneg %p102
      %p109 = scmp.eq.s32.totalorder %s27, 3
      %p110 = por %p108, %p109
      %p111 = scmp.ne.s32.totalorder %s103, %s106
      %p112 = scmp.eq.s32.totalorder %s27, 0
      %p113 = por %p111, %p112
      %p114 = scmp.ne.s32.totalorder %s103, %s106
      %p115 = scmp.eq.s32.totalorder %s32, 3
      %p116 = por %p114, %p115
      %p117 = scmp.ne.s32.totalorder %s106, %s107
      %p118 = scmp.eq.s32.totalorder %s32, 0
      %p119 = por %p117, %p118
      %p120 = scmp.ne.s32.totalorder %s106, %s107
      %p121 = scmp.eq.s32.totalorder %s33, 3
      %p122 = por %p120, %p121
      %p124 = scmp.ne.s32.totalorder %s107, %s123
      %p125 = scmp.eq.s32.totalorder %s33, 0
      %p126 = por %p124, %p125
      %s128 = sadd.s32 %s127, 1
      %p131 = scmp.eq.s32.totalorder %s27, 3
      %p132 = scmp.ne.s32.totalorder %s127, %s129
      %p133 = scmp.eq.s32.totalorder %s27, 0
      %p134 = por %p132, %p133
      %p135 = scmp.ne.s32.totalorder %s127, %s129
      %p136 = scmp.eq.s32.totalorder %s32, 3
      %p137 = por %p135, %p136
      %p138 = scmp.ne.s32.totalorder %s129, %s130
      %p139 = scmp.eq.s32.totalorder %s32, 0
      %p140 = por %p138, %p139
      %p141 = scmp.ne.s32.totalorder %s129, %s130
      %p142 = scmp.eq.s32.totalorder %s33, 3
      %p143 = por %p141, %p142
      %p145 = scmp.ne.s32.totalorder %s130, %s144
      %p146 = scmp.eq.s32.totalorder %s33, 0
      %p147 = por %p145, %p146
      %s149 = sadd.s32 %s148, 1
      %p152 = scmp.eq.s32.totalorder %s27, 3
      %p153 = scmp.ne.s32.totalorder %s148, %s150
      %p154 = scmp.eq.s32.totalorder %s27, 0
      %p155 = por %p153, %p154
      %p156 = scmp.ne.s32.totalorder %s148, %s150
      %p157 = scmp.eq.s32.totalorder %s32, 3
      %p158 = por %p156, %p157
      %p159 = scmp.ne.s32.totalorder %s150, %s151
      %p160 = scmp.eq.s32.totalorder %s32, 0
      %p161 = por %p159, %p160
      %p162 = scmp.ne.s32.totalorder %s150, %s151
      %p163 = scmp.eq.s32.totalorder %s33, 3
      %p164 = por %p162, %p163
      %p166 = scmp.ne.s32.totalorder %s151, %s165
      %p167 = scmp.eq.s32.totalorder %s33, 0
      %p168 = por %p166, %p167
      %s169 = ssub.s32 %s34, %s46
      %s170 = ssub.s32 %s35, %s42
      %s171 = sor.u32 %s169, %s170
      %p172 = scmp.eq.s32.totalorder %s171, 0
      %s174 = sadd.s32 %s173, 1
      %s175 = scalar_select %p172, %s173, %s174
      %p178 = pneg %p172
      %p179 = scmp.eq.s32.totalorder %s27, 3
      %p180 = por %p178, %p179
      %p181 = scmp.ne.s32.totalorder %s173, %s176
      %p182 = scmp.eq.s32.totalorder %s27, 0
      %p183 = por %p181, %p182
      %p184 = scmp.ne.s32.totalorder %s173, %s176
      %p185 = scmp.eq.s32.totalorder %s32, 3
      %p186 = por %p184, %p185
      %p187 = scmp.ne.s32.totalorder %s176, %s177
      %p188 = scmp.eq.s32.totalorder %s32, 0
      %p189 = por %p187, %p188
      %p190 = scmp.ne.s32.totalorder %s176, %s177
      %p191 = scmp.eq.s32.totalorder %s33, 3
      %p192 = por %p190, %p191
      %p194 = scmp.ne.s32.totalorder %s177, %s193
      %p195 = scmp.eq.s32.totalorder %s33, 0
      %p196 = por %p194, %p195
      %s197 = ssub.s32 %s34, %s46
      %s198 = ssub.s32 %s35, %s42
      %s199 = sor.u32 %s197, %s198
      %p200 = scmp.eq.s32.totalorder %s199, 0
      %s202 = sadd.s32 %s201, 1
      %s203 = scalar_select %p200, %s201, %s202
      %p206 = pneg %p200
      %p207 = scmp.eq.s32.totalorder %s27, 3
      %p208 = por %p206, %p207
      %p209 = scmp.ne.s32.totalorder %s201, %s204
      %p210 = scmp.eq.s32.totalorder %s27, 0
      %p211 = por %p209, %p210
      %p212 = scmp.ne.s32.totalorder %s201, %s204
      %p213 = scmp.eq.s32.totalorder %s32, 3
      %p214 = por %p212, %p213
      %p215 = scmp.ne.s32.totalorder %s204, %s205
      %p216 = scmp.eq.s32.totalorder %s32, 0
      %p217 = por %p215, %p216
      %p218 = scmp.ne.s32.totalorder %s204, %s205
      %p219 = scmp.eq.s32.totalorder %s33, 3
      %p220 = por %p218, %p219
      %p222 = scmp.ne.s32.totalorder %s205, %s221
      %p223 = scmp.eq.s32.totalorder %s33, 0
      %p224 = por %p222, %p223
      %s225 = ssub.s32 %s34, %s46
      %s226 = ssub.s32 %s35, %s42
      %s227 = sor.u32 %s225, %s226
      %p228 = scmp.eq.s32.totalorder %s227, 0
      %s230 = sadd.s32 %s229, 1
      %s231 = scalar_select %p228, %s229, %s230
      %p234 = pneg %p228
      %p235 = scmp.eq.s32.totalorder %s27, 3
      %p236 = por %p234, %p235
      %p237 = scmp.ne.s32.totalorder %s229, %s232
      %p238 = scmp.eq.s32.totalorder %s27, 0
      %p239 = por %p237, %p238
      %p240 = scmp.ne.s32.totalorder %s229, %s232
      %p241 = scmp.eq.s32.totalorder %s32, 3
      %p242 = por %p240, %p241
      %p243 = scmp.ne.s32.totalorder %s232, %s233
      %p244 = scmp.eq.s32.totalorder %s32, 0
      %p245 = por %p243, %p244
      %p246 = scmp.ne.s32.totalorder %s232, %s233
      %p247 = scmp.eq.s32.totalorder %s33, 3
      %p248 = por %p246, %p247
      %p250 = scmp.ne.s32.totalorder %s233, %s249
      %p251 = scmp.eq.s32.totalorder %s33, 0
      %p252 = por %p250, %p251
      %p253 = scmp.le.s32.totalorder 1, %s27
      %p254 = scmp.lt.s32.totalorder %s27, 5
      %p255 = pnand %p253, %p254
      %p256 = pneg %p255
      // Predicated region
      $region9: #{tpu_custom_call.1} parent=5 // pred_check
        _
      $region10: #{tpu_custom_call.1} parent=5 // pred_check_branch
        %258 = sbr.rel (%p255) target = $region12
      $region11: #{tpu_custom_call.1} parent=5 // pred_region
        %s259 = ssub.s32 %s27, 1
        // Predicated region
        $region13: #{tpu_custom_call.1} parent=11 // pred_check
          %p260 = pneg %p140
        $region14: #{tpu_custom_call.1} parent=11 // pred_check_branch
          %262 = sbr.rel (%p260) target = $region16
        $region15: #{tpu_custom_call.1} parent=11 // pred_region
          _
        $region16: #{tpu_custom_call.1} parent=11 // pred_fallthru
          _
        // Predicated region
        $region17: #{tpu_custom_call.1} parent=11 // pred_check
          %p263 = pneg %p161
        $region18: #{tpu_custom_call.1} parent=11 // pred_check_branch
          %265 = sbr.rel (%p263) target = $region20
        $region19: #{tpu_custom_call.1} parent=11 // pred_region
          %s267 = ssub.s32 2048, 2048
          %268 = vsyncadd [#allocation9], %s267
          %s269 = sshll.u32 [#allocation8], 4
          %s270 = int_to_ptr.vmem [resolvable:$true] %s269
          %275 = dma.hbm_to_vmem [thread:$0]  %s4, 2048, %s270, [#allocation9], 512, 512, 32
        $region20: #{tpu_custom_call.1} parent=11 // pred_fallthru
          _
      $region12: #{tpu_custom_call.1} parent=5 // pred_fallthru
        _
      %p276 = scmp.lt.s32.totalorder %s27, 4
      // Predicated region
      $region21: #{tpu_custom_call.1} parent=5 // pred_check
        %p277 = pneg %p276
      $region22: #{tpu_custom_call.1} parent=5 // pred_check_branch
        %279 = sbr.rel (%p277) target = $region24
      $region23: #{tpu_custom_call.1} parent=5 // pred_region
        // Predicated region
        $region25: #{tpu_custom_call.1} parent=23 // pred_check
          %p280 = pneg %p61
        $region26: #{tpu_custom_call.1} parent=23 // pred_check_branch
          %282 = sbr.rel (%p280) target = $region28
        $region27: #{tpu_custom_call.1} parent=23 // pred_region
          %s283 = sand.u32 %s51, 1
          %s284 = scalar_lea.sflag [#allocation3], %s283
          %s285 = sand.u32 %s51, 1
          %s286 = smul.addr %s285, 8
          %s287 = scalar_lea.vmem [#allocation2], %s286
          %s289 = ssub.s32 128, 128
          %290 = vsyncadd %s284, %s289
          %s291 = smul.addr %s34, 2
          %s292 = sadd.s32 %s35, %s291
          %s293 = smul.addr %s292, 128
          %s294 = scalar_lea.hbm %s0, %s293
          %s296 = sshll.u32 %s287, 4
          %s297 = int_to_ptr.vmem [resolvable:$true] %s296
          %299 = dma.hbm_to_vmem [thread:$0]  %s294, 128, %s297, %s284
        $region28: #{tpu_custom_call.1} parent=23 // pred_fallthru
          _
        // Predicated region
        $region29: #{tpu_custom_call.1} parent=23 // pred_check
          %p300 = pneg %p87
        $region30: #{tpu_custom_call.1} parent=23 // pred_check_branch
          %302 = sbr.rel (%p300) target = $region32
        $region31: #{tpu_custom_call.1} parent=23 // pred_region
          %s303 = sand.u32 %s27, 1
          %s304 = scalar_lea.sflag [#allocation6], %s303
          %s305 = sand.u32 %s77, 1
          %s306 = smul.addr %s305, 8
          %s307 = scalar_lea.vmem [#allocation5], %s306
          %s309 = ssub.s32 128, 128
          %310 = vsyncadd %s304, %s309
          %s311 = smul.addr %s35, 128
          %s312 = scalar_lea.hbm %s1, %s311
          %s314 = sshll.u32 %s307, 4
          %s315 = int_to_ptr.vmem [resolvable:$true] %s314
          %317 = dma.hbm_to_vmem [thread:$0]  %s312, 128, %s315, %s304
        $region32: #{tpu_custom_call.1} parent=23 // pred_fallthru
          _
        // Predicated region
        $region33: #{tpu_custom_call.1} parent=23 // pred_check
          %p318 = pneg %p113
        $region34: #{tpu_custom_call.1} parent=23 // pred_check_branch
          %320 = sbr.rel (%p318) target = $region36
        $region35: #{tpu_custom_call.1} parent=23 // pred_region
          %s321 = sand.u32 %s27, 1
          %s322 = scalar_lea.sflag [#allocation6], %s321
          %s323 = sand.u32 %s103, 1
          %s324 = smul.addr %s323, 8
          %s325 = scalar_lea.vmem [#allocation7], %s324
          %s327 = ssub.s32 128, 128
          %328 = vsyncadd %s322, %s327
          %s329 = smul.addr %s35, 128
          %s330 = scalar_lea.hbm %s2, %s329
          %s332 = sshll.u32 %s325, 4
          %s333 = int_to_ptr.vmem [resolvable:$true] %s332
          %335 = dma.hbm_to_vmem [thread:$0]  %s330, 128, %s333, %s322
        $region36: #{tpu_custom_call.1} parent=23 // pred_fallthru
          _
      $region24: #{tpu_custom_call.1} parent=5 // pred_fallthru
        _
      %p336 = scmp.le.s32.totalorder 1, %s27
      %p337 = scmp.lt.s32.totalorder %s27, 5
      %p338 = pnand %p336, %p337
      %p339 = pneg %p338
      // Predicated region
      $region37: #{tpu_custom_call.1} parent=5 // pred_check
        _
      $region38: #{tpu_custom_call.1} parent=5 // pred_check_branch
        %341 = sbr.rel (%p338) target = $region40
      $region39: #{tpu_custom_call.1} parent=5 // pred_region
        %s342 = ssub.s32 %s27, 1
        %s343 = sand.u32 %s54, 1
        %s344 = scalar_lea.sflag [#allocation3], %s343
        %s345 = sand.u32 %s54, 1
        %s346 = smul.addr %s345, 8
        %s347 = scalar_lea.vmem [#allocation2], %s346
        // Predicated region
        $region41: #{tpu_custom_call.1} parent=39 // pred_check
          %p348 = pneg %p67
        $region42: #{tpu_custom_call.1} parent=39 // pred_check_branch
          %350 = sbr.rel (%p348) target = $region44
        $region43: #{tpu_custom_call.1} parent=39 // pred_region
          %351 = dma.done %s344, 128
        $region44: #{tpu_custom_call.1} parent=39 // pred_fallthru
          _
        %s352 = sand.u32 %s32, 1
        %s353 = scalar_lea.sflag [#allocation6], %s352
        %s354 = sand.u32 %s80, 1
        %s355 = smul.addr %s354, 8
        %s356 = scalar_lea.vmem [#allocation5], %s355
        // Predicated region
        $region45: #{tpu_custom_call.1} parent=39 // pred_check
          %p357 = pneg %p93
        $region46: #{tpu_custom_call.1} parent=39 // pred_check_branch
          %359 = sbr.rel (%p357) target = $region48
        $region47: #{tpu_custom_call.1} parent=39 // pred_region
          %360 = dma.done %s353, 128
        $region48: #{tpu_custom_call.1} parent=39 // pred_fallthru
          _
        %s361 = sand.u32 %s32, 1
        %s362 = scalar_lea.sflag [#allocation6], %s361
        %s363 = sand.u32 %s106, 1
        %s364 = smul.addr %s363, 8
        %s365 = scalar_lea.vmem [#allocation7], %s364
        // Predicated region
        $region49: #{tpu_custom_call.1} parent=39 // pred_check
          %p366 = pneg %p119
        $region50: #{tpu_custom_call.1} parent=39 // pred_check_branch
          %368 = sbr.rel (%p366) target = $region52
        $region51: #{tpu_custom_call.1} parent=39 // pred_region
          %369 = dma.done %s362, 128
        $region52: #{tpu_custom_call.1} parent=39 // pred_fallthru
          _
        // Predicated region
        $region53: #{tpu_custom_call.1} parent=39 // pred_check
          %p370 = pneg %p161
        $region54: #{tpu_custom_call.1} parent=39 // pred_check_branch
          %372 = sbr.rel (%p370) target = $region56
        $region55: #{tpu_custom_call.1} parent=39 // pred_region
          %373 = dma.done [#allocation9], 2048
        $region56: #{tpu_custom_call.1} parent=39 // pred_fallthru
          _
        %s374 = sand.u32 %s54, 1
        %s375 = scalar_lea.sflag [#allocation3], %s374
        %s376 = sand.u32 %s54, 1
        %s377 = smul.addr %s376, 8
        %s378 = scalar_lea.vmem [#allocation2], %s377
        %p379 = pneg %p67
        %p380 = pneg %p64
        %s381 = sand.u32 %s32, 1
        %s382 = scalar_lea.sflag [#allocation6], %s381
        %s383 = sand.u32 %s80, 1
        %s384 = smul.addr %s383, 8
        %s385 = scalar_lea.vmem [#allocation5], %s384
        %p386 = pneg %p93
        %p387 = pneg %p90
        %s388 = sand.u32 %s32, 1
        %s389 = scalar_lea.sflag [#allocation6], %s388
        %s390 = sand.u32 %s106, 1
        %s391 = smul.addr %s390, 8
        %s392 = scalar_lea.vmem [#allocation7], %s391
        %p393 = pneg %p119
        %p394 = pneg %p116
        %p395 = pneg %p140
        %p396 = pneg %p137
        %p397 = pneg %p161
        %p398 = pneg %p158
        %p399 = pneg %p189
        %p400 = pneg %p186
        %s401 = sand.u32 %s176, 1
        %s402 = scalar_lea.sflag [#allocation4], %s401
        %s403 = sand.u32 %s176, 1
        %s404 = smul.addr %s403, 16
        %s405 = scalar_lea.vmem [#allocation10], %s404
        %p406 = pneg %p217
        %p407 = pneg %p214
        %s408 = sand.u32 %s32, 1
        %s409 = scalar_lea.sflag [#allocation12], %s408
        %s410 = sand.u32 %s204, 1
        %s411 = smul.addr %s410, 8
        %s412 = scalar_lea.vmem [#allocation11], %s411
        %p413 = pneg %p245
        %p414 = pneg %p242
        %s415 = sand.u32 %s32, 1
        %s416 = scalar_lea.sflag [#allocation12], %s415
        %s417 = sand.u32 %s232, 1
        %s418 = smul.addr %s417, 8
        %s419 = scalar_lea.vmem [#allocation13], %s418
        %v421 = vld [vmem:[%s347] sm:$0xff]
        %v422 = vmul.f32 %v421, %v421
        %vm423 = vcmask 261120
        %v424 = vsel %vm423, %v422, 0.0
        %425 = vadd.xlane.f32.xlu0 %v424
        %v426 = vpop.xlane.xlu0 %425
        %v427 = vrcp.pop 32.0
        %v428 = vmul.f32 %v426, %v427
        %v429 = vadd.f32 %v428, 1e-06
        %v430 = vrsqrt.pop %v429
        %v431 = vmul.f32 %v421, %v430
        %v432 = vld [vmem:[%s3] sm:$0x1]
        %v433 = vadd.f32 %v432, 1.0
        %v435 = vlaneseq
        %v436 = vshrl.u32 %v435, 7
        %v437 = vsub.s32 0, %v436
        %v438 = vrot.slane %v433, %v437
        %v440 = vmul.f32 %v431, %v438
        %v441 = vpack.c.bf16 %v440, %v440
        %v442 = vld [vmem:[#allocation8] sm:$0xff]
        %v443 = vld [vmem:[#allocation8 + $0x8] sm:$0xff]
        %v444 = vld [vmem:[#allocation8 + $0x10] sm:$0xff]
        %v445 = vld [vmem:[#allocation8 + $0x18] sm:$0xff]
        %v446 = vld [vmem:[#allocation8 + $0x20] sm:$0xff]
        %v447 = vld [vmem:[#allocation8 + $0x28] sm:$0xff]
        %v448 = vld [vmem:[#allocation8 + $0x30] sm:$0xff]
        %v449 = vld [vmem:[#allocation8 + $0x38] sm:$0xff]
        %v450 = vld [vmem:[#allocation8 + $0x40] sm:$0xff]
        %v451 = vld [vmem:[#allocation8 + $0x48] sm:$0xff]
        %v452 = vld [vmem:[#allocation8 + $0x50] sm:$0xff]
        %v453 = vld [vmem:[#allocation8 + $0x58] sm:$0xff]
        %v454 = vld [vmem:[#allocation8 + $0x60] sm:$0xff]
        %v455 = vld [vmem:[#allocation8 + $0x68] sm:$0xff]
        %v456 = vld [vmem:[#allocation8 + $0x70] sm:$0xff]
        %v457 = vld [vmem:[#allocation8 + $0x78] sm:$0xff]
        %v474 = vunpack.c.l.b16 %v442
        %v475 = vunpack.c.h.b16 %v442
        %v476 = vunpack.c.l.b16 %v443
        %v477 = vunpack.c.h.b16 %v443
        %v478 = vunpack.c.l.b16 %v444
        %v479 = vunpack.c.h.b16 %v444
        %v480 = vunpack.c.l.b16 %v445
        %v481 = vunpack.c.h.b16 %v445
        %v482 = vunpack.c.l.b16 %v446
        %v483 = vunpack.c.h.b16 %v446
        %v484 = vunpack.c.l.b16 %v447
        %v485 = vunpack.c.h.b16 %v447
        %v486 = vunpack.c.l.b16 %v448
        %v487 = vunpack.c.h.b16 %v448
        %v488 = vunpack.c.l.b16 %v449
        %v489 = vunpack.c.h.b16 %v449
        %v490 = vunpack.c.l.b16 %v450
        %v491 = vunpack.c.h.b16 %v450
        %v492 = vunpack.c.l.b16 %v451
        %v493 = vunpack.c.h.b16 %v451
        %v494 = vunpack.c.l.b16 %v452
        %v495 = vunpack.c.h.b16 %v452
        %v496 = vunpack.c.l.b16 %v453
        %v497 = vunpack.c.h.b16 %v453
        %v498 = vunpack.c.l.b16 %v454
        %v499 = vunpack.c.h.b16 %v454
        %v500 = vunpack.c.l.b16 %v455
        %v501 = vunpack.c.h.b16 %v455
        %v502 = vunpack.c.l.b16 %v456
        %v503 = vunpack.c.h.b16 %v456
        %v504 = vunpack.c.l.b16 %v457
        %v505 = vunpack.c.h.b16 %v457
        %v506 = vpack.c.b16 %v482, %v474
        %v507 = vpack.c.b16 %v483, %v475
        %v508 = vpack.c.b16 %v484, %v476
        %v509 = vpack.c.b16 %v485, %v477
        %v510 = vpack.c.b16 %v486, %v478
        %v511 = vpack.c.b16 %v487, %v479
        %v512 = vpack.c.b16 %v488, %v480
        %v513 = vpack.c.b16 %v489, %v481
        %v514 = vpack.c.b16 %v498, %v490
        %v515 = vpack.c.b16 %v499, %v491
        %v516 = vpack.c.b16 %v500, %v492
        %v517 = vpack.c.b16 %v501, %v493
        %v518 = vpack.c.b16 %v502, %v494
        %v519 = vpack.c.b16 %v503, %v495
        %v520 = vpack.c.b16 %v504, %v496
        %v521 = vpack.c.b16 %v505, %v497
        %v539 = vsel %vm423, %v441, 0
        %541 = vmatprep.subr.bf16.mxu0 0
        %542 = vmatpush1.bf16.msra.mxu0 0
        %543 = vmatprep.subr.bf16.mxu0 0
        %544 = vmatpush1.bf16.msra.mxu0 0
        %545 = vmatprep.subr.bf16.mxu0 0
        %546 = vmatpush1.bf16.msra.mxu0 0
        %547 = vmatprep.subr.bf16.mxu0 0
        %548 = vmatpush1.bf16.msra.mxu0 0
        %549 = vmatprep.subr.bf16.mxu0 0
        %550 = vmatpush1.bf16.msra.mxu0 0
        %551 = vmatprep.subr.bf16.mxu0 0
        %552 = vmatpush1.bf16.msra.mxu0 0
        %553 = vmatprep.subr.bf16.mxu0 %v515
        %554 = vmatpush1.bf16.msra.mxu0 %v514
        %555 = vmatprep.subr.bf16.mxu0 %v507
        %556 = vmatpush1.bf16.msra.mxu0 %v506
        %557 = vmatprep.subr.bf16.mxu0 0
        %558 = vmatpush2.bf16.msra.mxu0 0
        %559 = vmatprep.subr.bf16.mxu0 0
        %560 = vmatpush2.bf16.msra.mxu0 0
        %561 = vmatprep.subr.bf16.mxu0 0
        %562 = vmatpush2.bf16.msra.mxu0 0
        %563 = vmatprep.subr.bf16.mxu0 0
        %564 = vmatpush2.bf16.msra.mxu0 0
        %565 = vmatprep.subr.bf16.mxu0 0
        %566 = vmatpush2.bf16.msra.mxu0 0
        %567 = vmatprep.subr.bf16.mxu0 0
        %568 = vmatpush2.bf16.msra.mxu0 0
        %569 = vmatprep.subr.bf16.mxu0 0
        %570 = vmatpush2.bf16.msra.mxu0 0
        %571 = vmatprep.subr.bf16.mxu0 0
        %572 = vmatpush2.bf16.msra.mxu0 0
        %573 = vmatprep.mubr.bf16.mxu0 0
        %574 = vmatmul.mubr.bf16.gmra.mxu0 %v539
        %v575 = vpop.f32.mrf.mxu0
        %v576 = vadd.f32 0.0, %v575
        %v577 = vpop.f32.mrf.mxu0
        %v578 = vadd.f32 0.0, %v577
        %v579 = vpop.f32.mrf.mxu0
        %v580 = vpop.f32.mrf.mxu0
        %581 = vdwg.mxu0
        %582 = vmatprep.subr.bf16.mxu0 0
        %583 = vmatpush1.bf16.msra.mxu0 0
        %584 = vmatprep.subr.bf16.mxu0 0
        %585 = vmatpush1.bf16.msra.mxu0 0
        %586 = vmatprep.subr.bf16.mxu0 0
        %587 = vmatpush1.bf16.msra.mxu0 0
        %588 = vmatprep.subr.bf16.mxu0 0
        %589 = vmatpush1.bf16.msra.mxu0 0
        %590 = vmatprep.subr.bf16.mxu0 0
        %591 = vmatpush1.bf16.msra.mxu0 0
        %592 = vmatprep.subr.bf16.mxu0 0
        %593 = vmatpush1.bf16.msra.mxu0 0
        %594 = vmatprep.subr.bf16.mxu0 %v517
        %595 = vmatpush1.bf16.msra.mxu0 %v516
        %596 = vmatprep.subr.bf16.mxu0 %v509
        %597 = vmatpush1.bf16.msra.mxu0 %v508
        %598 = vmatprep.subr.bf16.mxu0 0
        %599 = vmatpush2.bf16.msra.mxu0 0
        %600 = vmatprep.subr.bf16.mxu0 0
        %601 = vmatpush2.bf16.msra.mxu0 0
        %602 = vmatprep.subr.bf16.mxu0 0
        %603 = vmatpush2.bf16.msra.mxu0 0
        %604 = vmatprep.subr.bf16.mxu0 0
        %605 = vmatpush2.bf16.msra.mxu0 0
        %606 = vmatprep.subr.bf16.mxu0 0
        %607 = vmatpush2.bf16.msra.mxu0 0
        %608 = vmatprep.subr.bf16.mxu0 0
        %609 = vmatpush2.bf16.msra.mxu0 0
        %610 = vmatprep.subr.bf16.mxu0 0
        %611 = vmatpush2.bf16.msra.mxu0 0
        %612 = vmatprep.subr.bf16.mxu0 0
        %613 = vmatpush2.bf16.msra.mxu0 0
        %614 = vmatprep.mubr.bf16.mxu0 0
        %615 = vmatmul.mubr.bf16.gmra.mxu0 %v539
        %v616 = vpop.f32.mrf.mxu0
        %v617 = vadd.f32 0.0, %v616
        %v618 = vpop.f32.mrf.mxu0
        %v619 = vadd.f32 0.0, %v618
        %v620 = vpop.f32.mrf.mxu0
        %v621 = vpop.f32.mrf.mxu0
        %622 = vdwg.mxu0
        %623 = vmatprep.subr.bf16.mxu0 0
        %624 = vmatpush1.bf16.msra.mxu0 0
        %625 = vmatprep.subr.bf16.mxu0 0
        %626 = vmatpush1.bf16.msra.mxu0 0
        %627 = vmatprep.subr.bf16.mxu0 0
        %628 = vmatpush1.bf16.msra.mxu0 0
        %629 = vmatprep.subr.bf16.mxu0 0
        %630 = vmatpush1.bf16.msra.mxu0 0
        %631 = vmatprep.subr.bf16.mxu0 0
        %632 = vmatpush1.bf16.msra.mxu0 0
        %633 = vmatprep.subr.bf16.mxu0 0
        %634 = vmatpush1.bf16.msra.mxu0 0
        %635 = vmatprep.subr.bf16.mxu0 %v519
        %636 = vmatpush1.bf16.msra.mxu0 %v518
        %637 = vmatprep.subr.bf16.mxu0 %v511
        %638 = vmatpush1.bf16.msra.mxu0 %v510
        %639 = vmatprep.subr.bf16.mxu0 0
        %640 = vmatpush2.bf16.msra.mxu0 0
        %641 = vmatprep.subr.bf16.mxu0 0
        %642 = vmatpush2.bf16.msra.mxu0 0
        %643 = vmatprep.subr.bf16.mxu0 0
        %644 = vmatpush2.bf16.msra.mxu0 0
        %645 = vmatprep.subr.bf16.mxu0 0
        %646 = vmatpush2.bf16.msra.mxu0 0
        %647 = vmatprep.subr.bf16.mxu0 0
        %648 = vmatpush2.bf16.msra.mxu0 0
        %649 = vmatprep.subr.bf16.mxu0 0
        %650 = vmatpush2.bf16.msra.mxu0 0
        %651 = vmatprep.subr.bf16.mxu0 0
        %652 = vmatpush2.bf16.msra.mxu0 0
        %653 = vmatprep.subr.bf16.mxu0 0
        %654 = vmatpush2.bf16.msra.mxu0 0
        %655 = vmatprep.mubr.bf16.mxu0 0
        %656 = vmatmul.mubr.bf16.gmra.mxu0 %v539
        %v657 = vpop.f32.mrf.mxu0
        %v658 = vadd.f32 0.0, %v657
        %v659 = vpop.f32.mrf.mxu0
        %v660 = vadd.f32 0.0, %v659
        %v661 = vpop.f32.mrf.mxu0
        %v662 = vpop.f32.mrf.mxu0
        %663 = vdwg.mxu0
        %664 = vmatprep.subr.bf16.mxu0 0
        %665 = vmatpush1.bf16.msra.mxu0 0
        %666 = vmatprep.subr.bf16.mxu0 0
        %667 = vmatpush1.bf16.msra.mxu0 0
        %668 = vmatprep.subr.bf16.mxu0 0
        %669 = vmatpush1.bf16.msra.mxu0 0
        %670 = vmatprep.subr.bf16.mxu0 0
        %671 = vmatpush1.bf16.msra.mxu0 0
        %672 = vmatprep.subr.bf16.mxu0 0
        %673 = vmatpush1.bf16.msra.mxu0 0
        %674 = vmatprep.subr.bf16.mxu0 0
        %675 = vmatpush1.bf16.msra.mxu0 0
        %676 = vmatprep.subr.bf16.mxu0 %v521
        %677 = vmatpush1.bf16.msra.mxu0 %v520
        %678 = vmatprep.subr.bf16.mxu0 %v513
        %679 = vmatpush1.bf16.msra.mxu0 %v512
        %680 = vmatprep.subr.bf16.mxu0 0
        %681 = vmatpush2.bf16.msra.mxu0 0
        %682 = vmatprep.subr.bf16.mxu0 0
        %683 = vmatpush2.bf16.msra.mxu0 0
        %684 = vmatprep.subr.bf16.mxu0 0
        %685 = vmatpush2.bf16.msra.mxu0 0
        %686 = vmatprep.subr.bf16.mxu0 0
        %687 = vmatpush2.bf16.msra.mxu0 0
        %688 = vmatprep.subr.bf16.mxu0 0
        %689 = vmatpush2.bf16.msra.mxu0 0
        %690 = vmatprep.subr.bf16.mxu0 0
        %691 = vmatpush2.bf16.msra.mxu0 0
        %692 = vmatprep.subr.bf16.mxu0 0
        %693 = vmatpush2.bf16.msra.mxu0 0
        %694 = vmatprep.subr.bf16.mxu0 0
        %695 = vmatpush2.bf16.msra.mxu0 0
        %696 = vmatprep.mubr.bf16.mxu0 0
        %697 = vmatmul.mubr.bf16.gmra.mxu0 %v539
        %v698 = vpop.f32.mrf.mxu0
        %v699 = vadd.f32 0.0, %v698
        %v700 = vpop.f32.mrf.mxu0
        %v701 = vadd.f32 0.0, %v700
        %v702 = vpop.f32.mrf.mxu0
        %v703 = vpop.f32.mrf.mxu0
        %704 = vdwg.mxu0
        %v705 = vcombine.low %v576, %v617
        %v706 = vcombine.high %v576, %v617
        %v708 = vunpack.c.l.s4 1983009808
        %v709 = vunpack.c.0.s8 %v708
        %v710 = vlaneseq
        %v711 = vshrl.u32 %v710, 7
        %v712 = vsub.s32 %v709, %v711
        %v713 = vrot.slane %v705, %v712
        %v715 = vunpack.c.l.s4 1983009808
        %v716 = vunpack.c.0.s8 %v715
        %v717 = vlaneseq
        %v718 = vshrl.u32 %v717, 7
        %v719 = vsub.s32 %v716, %v718
        %v720 = vrot.slane %v706, %v719
        %v721 = vcombine.low %v578, %v619
        %v722 = vcombine.high %v578, %v619
        %v724 = vunpack.c.l.s4 1983009808
        %v725 = vunpack.c.0.s8 %v724
        %v726 = vlaneseq
        %v727 = vshrl.u32 %v726, 7
        %v728 = vsub.s32 %v725, %v727
        %v729 = vrot.slane %v721, %v728
        %v731 = vunpack.c.l.s4 1983009808
        %v732 = vunpack.c.0.s8 %v731
        %v733 = vlaneseq
        %v734 = vshrl.u32 %v733, 7
        %v735 = vsub.s32 %v732, %v734
        %v736 = vrot.slane %v722, %v735
        %v737 = vcombine.low %v713, %v729
        %v738 = vcombine.high %v713, %v729
        %v740 = vunpack.c.l.s4 1934713408
        %v741 = vunpack.c.0.s8 %v740
        %v742 = vlaneseq
        %v743 = vshrl.u32 %v742, 7
        %v744 = vsub.s32 %v741, %v743
        %v745 = vrot.slane %v737, %v744
        %v747 = vunpack.c.l.s4 1934713408
        %v748 = vunpack.c.0.s8 %v747
        %v749 = vlaneseq
        %v750 = vshrl.u32 %v749, 7
        %v751 = vsub.s32 %v748, %v750
        %v752 = vrot.slane %v738, %v751
        %v753 = vcombine.low %v720, %v736
        %v754 = vcombine.high %v720, %v736
        %v756 = vunpack.c.l.s4 1934713408
        %v757 = vunpack.c.0.s8 %v756
        %v758 = vlaneseq
        %v759 = vshrl.u32 %v758, 7
        %v760 = vsub.s32 %v757, %v759
        %v761 = vrot.slane %v753, %v760
        %v763 = vunpack.c.l.s4 1934713408
        %v764 = vunpack.c.0.s8 %v763
        %v765 = vlaneseq
        %v766 = vshrl.u32 %v765, 7
        %v767 = vsub.s32 %v764, %v766
        %v768 = vrot.slane %v754, %v767
        %v769 = vcombine.high %v745, 0.0
        %v770 = vcombine.high %v752, 0.0
        %v771 = vcombine.high %v761, 0.0
        %v772 = vcombine.high %v768, 0.0
        %v773 = vcombine.low %v745, %v752
        %v775 = vunpack.c.l.s4 1983009808
        %v776 = vunpack.c.0.s8 %v775
        %v777 = vlaneseq
        %v778 = vshrl.u32 %v777, 7
        %v779 = vsub.s32 %v776, %v778
        %v780 = vrot.slane %v773, %v779
        %v781 = vcombine.low %v769, %v770
        %v783 = vunpack.c.l.s4 1983009808
        %v784 = vunpack.c.0.s8 %v783
        %v785 = vlaneseq
        %v786 = vshrl.u32 %v785, 7
        %v787 = vsub.s32 %v784, %v786
        %v788 = vrot.slane %v781, %v787
        %v789 = vcombine.low %v761, %v768
        %v791 = vunpack.c.l.s4 1983009808
        %v792 = vunpack.c.0.s8 %v791
        %v793 = vlaneseq
        %v794 = vshrl.u32 %v793, 7
        %v795 = vsub.s32 %v792, %v794
        %v796 = vrot.slane %v789, %v795
        %v797 = vcombine.low %v771, %v772
        %v799 = vunpack.c.l.s4 1983009808
        %v800 = vunpack.c.0.s8 %v799
        %v801 = vlaneseq
        %v802 = vshrl.u32 %v801, 7
        %v803 = vsub.s32 %v800, %v802
        %v804 = vrot.slane %v797, %v803
        %v805 = vcombine.low %v780, %v788
        %v806 = vcombine.high %v780, %v788
        %v808 = vunpack.c.l.s4 1934713408
        %v809 = vunpack.c.0.s8 %v808
        %v810 = vlaneseq
        %v811 = vshrl.u32 %v810, 7
        %v812 = vsub.s32 %v809, %v811
        %v813 = vrot.slane %v805, %v812
        %v815 = vunpack.c.l.s4 1934713408
        %v816 = vunpack.c.0.s8 %v815
        %v817 = vlaneseq
        %v818 = vshrl.u32 %v817, 7
        %v819 = vsub.s32 %v816, %v818
        %v820 = vrot.slane %v806, %v819
        %v821 = vcombine.low %v796, %v804
        %v822 = vcombine.high %v796, %v804
        %v824 = vunpack.c.l.s4 1934713408
        %v825 = vunpack.c.0.s8 %v824
        %v826 = vlaneseq
        %v827 = vshrl.u32 %v826, 7
        %v828 = vsub.s32 %v825, %v827
        %v829 = vrot.slane %v821, %v828
        %v831 = vunpack.c.l.s4 1934713408
        %v832 = vunpack.c.0.s8 %v831
        %v833 = vlaneseq
        %v834 = vshrl.u32 %v833, 7
        %v835 = vsub.s32 %v832, %v834
        %v836 = vrot.slane %v822, %v835
        %v837 = vcombine.low %v813, %v829
        %v838 = vcombine.high %v813, %v829
        %v839 = vcombine.low %v820, %v836
        %v840 = vcombine.high %v820, %v836
        %v841 = vcombine.high %v658, 0.0
        %v843 = vunpack.c.l.s4 1983009808
        %v844 = vunpack.c.0.s8 %v843
        %v845 = vlaneseq
        %v846 = vshrl.u32 %v845, 7
        %v847 = vsub.s32 %v844, %v846
        %v848 = vrot.slane %v658, %v847
        %v850 = vunpack.c.l.s4 1983009808
        %v851 = vunpack.c.0.s8 %v850
        %v852 = vlaneseq
        %v853 = vshrl.u32 %v852, 7
        %v854 = vsub.s32 %v851, %v853
        %v855 = vrot.slane %v841, %v854
        %v856 = vcombine.high %v660, 0.0
        %v858 = vunpack.c.l.s4 1983009808
        %v859 = vunpack.c.0.s8 %v858
        %v860 = vlaneseq
        %v861 = vshrl.u32 %v860, 7
        %v862 = vsub.s32 %v859, %v861
        %v863 = vrot.slane %v660, %v862
        %v865 = vunpack.c.l.s4 1983009808
        %v866 = vunpack.c.0.s8 %v865
        %v867 = vlaneseq
        %v868 = vshrl.u32 %v867, 7
        %v869 = vsub.s32 %v866, %v868
        %v870 = vrot.slane %v856, %v869
        %v871 = vcombine.low %v848, %v863
        %v872 = vcombine.high %v848, %v863
        %v874 = vunpack.c.l.s4 1934713408
        %v875 = vunpack.c.0.s8 %v874
        %v876 = vlaneseq
        %v877 = vshrl.u32 %v876, 7
        %v878 = vsub.s32 %v875, %v877
        %v879 = vrot.slane %v871, %v878
        %v881 = vunpack.c.l.s4 1934713408
        %v882 = vunpack.c.0.s8 %v881
        %v883 = vlaneseq
        %v884 = vshrl.u32 %v883, 7
        %v885 = vsub.s32 %v882, %v884
        %v886 = vrot.slane %v872, %v885
        %v887 = vcombine.low %v855, %v870
        %v888 = vcombine.high %v855, %v870
        %v890 = vunpack.c.l.s4 1934713408
        %v891 = vunpack.c.0.s8 %v890
        %v892 = vlaneseq
        %v893 = vshrl.u32 %v892, 7
        %v894 = vsub.s32 %v891, %v893
        %v895 = vrot.slane %v887, %v894
        %v897 = vunpack.c.l.s4 1934713408
        %v898 = vunpack.c.0.s8 %v897
        %v899 = vlaneseq
        %v900 = vshrl.u32 %v899, 7
        %v901 = vsub.s32 %v898, %v900
        %v902 = vrot.slane %v888, %v901
        %v903 = vcombine.high %v879, 0.0
        %v904 = vcombine.high %v886, 0.0
        %v905 = vcombine.high %v895, 0.0
        %v906 = vcombine.high %v902, 0.0
        %v907 = vcombine.low %v879, %v886
        %v909 = vunpack.c.l.s4 1983009808
        %v910 = vunpack.c.0.s8 %v909
        %v911 = vlaneseq
        %v912 = vshrl.u32 %v911, 7
        %v913 = vsub.s32 %v910, %v912
        %v914 = vrot.slane %v907, %v913
        %v915 = vcombine.low %v903, %v904
        %v917 = vunpack.c.l.s4 1983009808
        %v918 = vunpack.c.0.s8 %v917
        %v919 = vlaneseq
        %v920 = vshrl.u32 %v919, 7
        %v921 = vsub.s32 %v918, %v920
        %v922 = vrot.slane %v915, %v921
        %v923 = vcombine.low %v895, %v902
        %v925 = vunpack.c.l.s4 1983009808
        %v926 = vunpack.c.0.s8 %v925
        %v927 = vlaneseq
        %v928 = vshrl.u32 %v927, 7
        %v929 = vsub.s32 %v926, %v928
        %v930 = vrot.slane %v923, %v929
        %v931 = vcombine.low %v905, %v906
        %v933 = vunpack.c.l.s4 1983009808
        %v934 = vunpack.c.0.s8 %v933
        %v935 = vlaneseq
        %v936 = vshrl.u32 %v935, 7
        %v937 = vsub.s32 %v934, %v936
        %v938 = vrot.slane %v931, %v937
        %v939 = vcombine.low %v914, %v922
        %v941 = vunpack.c.l.s4 1934713408
        %v942 = vunpack.c.0.s8 %v941
        %v943 = vlaneseq
        %v944 = vshrl.u32 %v943, 7
        %v945 = vsub.s32 %v942, %v944
        %v946 = vrot.slane %v939, %v945
        %v947 = vcombine.low %v930, %v938
        %v949 = vunpack.c.l.s4 1934713408
        %v950 = vunpack.c.0.s8 %v949
        %v951 = vlaneseq
        %v952 = vshrl.u32 %v951, 7
        %v953 = vsub.s32 %v950, %v952
        %v954 = vrot.slane %v947, %v953
        %v955 = vcombine.low %v946, %v954
        %v956 = vcombine.high %v946, %v954
        %v957 = vcombine.high %v699, 0.0
        %v959 = vunpack.c.l.s4 1983009808
        %v960 = vunpack.c.0.s8 %v959
        %v961 = vlaneseq
        %v962 = vshrl.u32 %v961, 7
        %v963 = vsub.s32 %v960, %v962
        %v964 = vrot.slane %v699, %v963
        %v966 = vunpack.c.l.s4 1983009808
        %v967 = vunpack.c.0.s8 %v966
        %v968 = vlaneseq
        %v969 = vshrl.u32 %v968, 7
        %v970 = vsub.s32 %v967, %v969
        %v971 = vrot.slane %v957, %v970
        %v972 = vcombine.high %v701, 0.0
        %v974 = vunpack.c.l.s4 1983009808
        %v975 = vunpack.c.0.s8 %v974
        %v976 = vlaneseq
        %v977 = vshrl.u32 %v976, 7
        %v978 = vsub.s32 %v975, %v977
        %v979 = vrot.slane %v701, %v978
        %v981 = vunpack.c.l.s4 1983009808
        %v982 = vunpack.c.0.s8 %v981
        %v983 = vlaneseq
        %v984 = vshrl.u32 %v983, 7
        %v985 = vsub.s32 %v982, %v984
        %v986 = vrot.slane %v972, %v985
        %v987 = vcombine.low %v964, %v979
        %v988 = vcombine.high %v964, %v979
        %v990 = vunpack.c.l.s4 1934713408
        %v991 = vunpack.c.0.s8 %v990
        %v992 = vlaneseq
        %v993 = vshrl.u32 %v992, 7
        %v994 = vsub.s32 %v991, %v993
        %v995 = vrot.slane %v987, %v994
        %v997 = vunpack.c.l.s4 1934713408
        %v998 = vunpack.c.0.s8 %v997
        %v999 = vlaneseq
        %v1000 = vshrl.u32 %v999, 7
        %v1001 = vsub.s32 %v998, %v1000
        %v1002 = vrot.slane %v988, %v1001
        %v1003 = vcombine.low %v971, %v986
        %v1004 = vcombine.high %v971, %v986
        %v1006 = vunpack.c.l.s4 1934713408
        %v1007 = vunpack.c.0.s8 %v1006
        %v1008 = vlaneseq
        %v1009 = vshrl.u32 %v1008, 7
        %v1010 = vsub.s32 %v1007, %v1009
        %v1011 = vrot.slane %v1003, %v1010
        %v1013 = vunpack.c.l.s4 1934713408
        %v1014 = vunpack.c.0.s8 %v1013
        %v1015 = vlaneseq
        %v1016 = vshrl.u32 %v1015, 7
        %v1017 = vsub.s32 %v1014, %v1016
        %v1018 = vrot.slane %v1004, %v1017
        %v1019 = vcombine.high %v995, 0.0
        %v1020 = vcombine.high %v1002, 0.0
        %v1021 = vcombine.high %v1011, 0.0
        %v1022 = vcombine.high %v1018, 0.0
        %v1023 = vcombine.low %v995, %v1002
        %v1025 = vunpack.c.l.s4 1983009808
        %v1026 = vunpack.c.0.s8 %v1025
        %v1027 = vlaneseq
        %v1028 = vshrl.u32 %v1027, 7
        %v1029 = vsub.s32 %v1026, %v1028
        %v1030 = vrot.slane %v1023, %v1029
        %v1031 = vcombine.low %v1019, %v1020
        %v1033 = vunpack.c.l.s4 1983009808
        %v1034 = vunpack.c.0.s8 %v1033
        %v1035 = vlaneseq
        %v1036 = vshrl.u32 %v1035, 7
        %v1037 = vsub.s32 %v1034, %v1036
        %v1038 = vrot.slane %v1031, %v1037
        %v1039 = vcombine.low %v1011, %v1018
        %v1041 = vunpack.c.l.s4 1983009808
        %v1042 = vunpack.c.0.s8 %v1041
        %v1043 = vlaneseq
        %v1044 = vshrl.u32 %v1043, 7
        %v1045 = vsub.s32 %v1042, %v1044
        %v1046 = vrot.slane %v1039, %v1045
        %v1047 = vcombine.low %v1021, %v1022
        %v1049 = vunpack.c.l.s4 1983009808
        %v1050 = vunpack.c.0.s8 %v1049
        %v1051 = vlaneseq
        %v1052 = vshrl.u32 %v1051, 7
        %v1053 = vsub.s32 %v1050, %v1052
        %v1054 = vrot.slane %v1047, %v1053
        %v1055 = vcombine.low %v1030, %v1038
        %v1057 = vunpack.c.l.s4 1934713408
        %v1058 = vunpack.c.0.s8 %v1057
        %v1059 = vlaneseq
        %v1060 = vshrl.u32 %v1059, 7
        %v1061 = vsub.s32 %v1058, %v1060
        %v1062 = vrot.slane %v1055, %v1061
        %v1063 = vcombine.low %v1046, %v1054
        %v1065 = vunpack.c.l.s4 1934713408
        %v1066 = vunpack.c.0.s8 %v1065
        %v1067 = vlaneseq
        %v1068 = vshrl.u32 %v1067, 7
        %v1069 = vsub.s32 %v1066, %v1068
        %v1070 = vrot.slane %v1063, %v1069
        %v1071 = vcombine.low %v1062, %v1070
        %v1072 = vcombine.high %v1062, %v1070
        %v1073 = vlaneseq
        %v1074 = vand.u32 %v1073, 127
        %vm1075 = vcmp.lt.s32.totalorder %v1074, 64
        %v1076 = vsel %vm1075, -1.0, 1.0
        %v1077 = vld [vmem:[%s356] sm:$0xff]
        %v1078 = vld [vmem:[%s365] sm:$0xff]
        %v1079 = vmul.f32 %v1076, %v1078
        %v1080 = vmul.f32 %v837, %v1077
        %v1081 = vmul.f32 %v838, %v1077
        %v1082 = vmul.f32 %v839, %v1077
        %v1083 = vmul.f32 %v840, %v1077
        %1084 = vrot.lane.b32.xlu0 %v837, 64
        %v1085 = vpop.permute.xlu0 %1084
        %1086 = vrot.lane.b32.xlu0 %v838, 64
        %v1087 = vpop.permute.xlu0 %1086
        %1088 = vrot.lane.b32.xlu0 %v839, 64
        %v1089 = vpop.permute.xlu0 %1088
        %1090 = vrot.lane.b32.xlu0 %v840, 64
        %v1091 = vpop.permute.xlu0 %1090
        %v1092 = vmul.f32 %v1085, %v1079
        %v1093 = vmul.f32 %v1087, %v1079
        %v1094 = vmul.f32 %v1089, %v1079
        %v1095 = vmul.f32 %v1091, %v1079
        %v1096 = vadd.f32 %v1080, %v1092
        %v1097 = vadd.f32 %v1081, %v1093
        %v1098 = vadd.f32 %v1082, %v1094
        %v1099 = vadd.f32 %v1083, %v1095
        %v1100 = vpack.c.bf16 %v1096, %v1096
        %v1101 = vpack.c.bf16 %v1097, %v1097
        %v1102 = vpack.c.bf16 %v1098, %v1098
        %v1103 = vpack.c.bf16 %v1099, %v1099
        %1104 = vst [vmem:[%s405] sm:$0xf] %v1100
        %1105 = vst [vmem:[%s405 + $0x4] sm:$0xf] %v1101
        %1106 = vst [vmem:[%s405 + $0x8] sm:$0xf] %v1102
        %1107 = vst [vmem:[%s405 + $0xc] sm:$0xf] %v1103
        %v1108 = vmul.f32 %v955, %v1077
        %v1109 = vmul.f32 %v956, %v1077
        %1110 = vrot.lane.b32.xlu0 %v955, 64
        %v1111 = vpop.permute.xlu0 %1110
        %1112 = vrot.lane.b32.xlu0 %v956, 64
        %v1113 = vpop.permute.xlu0 %1112
        %v1114 = vmul.f32 %v1111, %v1079
        %v1115 = vmul.f32 %v1113, %v1079
        %v1116 = vadd.f32 %v1108, %v1114
        %v1117 = vadd.f32 %v1109, %v1115
        %v1118 = vpack.c.bf16 %v1116, %v1116
        %v1119 = vpack.c.bf16 %v1117, %v1117
        %1120 = vst [vmem:[%s412] sm:$0xf] %v1118
        %1121 = vst [vmem:[%s412 + $0x4] sm:$0xf] %v1119
        %v1122 = vpack.c.bf16 %v1071, %v1071
        %v1123 = vpack.c.bf16 %v1072, %v1072
        %1124 = vst [vmem:[%s419] sm:$0xf] %v1122
        %1125 = vst [vmem:[%s419 + $0x4] sm:$0xf] %v1123
        %s1126 = sand.u32 %s176, 1
        %s1127 = scalar_lea.sflag [#allocation4], %s1126
        %s1128 = sand.u32 %s176, 1
        %s1129 = smul.addr %s1128, 16
        %s1130 = scalar_lea.vmem [#allocation10], %s1129
        %s1131 = sand.u32 %s32, 1
        %s1132 = scalar_lea.sflag [#allocation12], %s1131
        %s1133 = sand.u32 %s204, 1
        %s1134 = smul.addr %s1133, 8
        %s1135 = scalar_lea.vmem [#allocation11], %s1134
        %s1136 = sand.u32 %s32, 1
        %s1137 = scalar_lea.sflag [#allocation12], %s1136
        %s1138 = sand.u32 %s232, 1
        %s1139 = smul.addr %s1138, 8
        %s1140 = scalar_lea.vmem [#allocation13], %s1139
        // Predicated region
        $region57: #{tpu_custom_call.1} parent=39 // pred_check
          %p1141 = pneg %p186
        $region58: #{tpu_custom_call.1} parent=39 // pred_check_branch
          %1143 = sbr.rel (%p1141) target = $region60
        $region59: #{tpu_custom_call.1} parent=39 // pred_region
          %s1145 = ssub.s32 256, 256
          %1146 = vsyncadd %s1127, %s1145
          %s1147 = smul.addr %s36, 8
          %s1148 = sadd.s32 %s37, %s1147
          %s1149 = smul.addr %s1148, 64
          %s1150 = scalar_lea.hbm %s5, %s1149
          %s1151 = sshll.u32 %s1130, 4
          %s1152 = int_to_ptr.vmem [resolvable:$true] %s1151
          %1157 = dma.vmem_to_hbm [thread:$0]  %s1152, 256, %s1150, %s1127, 64, 128, 4
        $region60: #{tpu_custom_call.1} parent=39 // pred_fallthru
          _
        // Predicated region
        $region61: #{tpu_custom_call.1} parent=39 // pred_check
          %p1158 = pneg %p214
        $region62: #{tpu_custom_call.1} parent=39 // pred_check_branch
          %1160 = sbr.rel (%p1158) target = $region64
        $region63: #{tpu_custom_call.1} parent=39 // pred_region
          %s1162 = ssub.s32 128, 128
          %1163 = vsyncadd %s1132, %s1162
          %s1164 = smul.addr %s36, 4
          %s1165 = sadd.s32 %s37, %s1164
          %s1166 = smul.addr %s1165, 64
          %s1167 = scalar_lea.hbm %s6, %s1166
          %s1168 = sshll.u32 %s1135, 4
          %s1169 = int_to_ptr.vmem [resolvable:$true] %s1168
          %1174 = dma.vmem_to_hbm [thread:$0]  %s1169, 128, %s1167, %s1132, 64, 128, 4
        $region64: #{tpu_custom_call.1} parent=39 // pred_fallthru
          _
        // Predicated region
        $region65: #{tpu_custom_call.1} parent=39 // pred_check
          %p1175 = pneg %p242
        $region66: #{tpu_custom_call.1} parent=39 // pred_check_branch
          %1177 = sbr.rel (%p1175) target = $region68
        $region67: #{tpu_custom_call.1} parent=39 // pred_region
          %s1179 = ssub.s32 128, 128
          %1180 = vsyncadd %s1137, %s1179
          %s1181 = smul.addr %s36, 4
          %s1182 = sadd.s32 %s37, %s1181
          %s1183 = smul.addr %s1182, 64
          %s1184 = scalar_lea.hbm %s7, %s1183
          %s1185 = sshll.u32 %s1140, 4
          %s1186 = int_to_ptr.vmem [resolvable:$true] %s1185
          %1191 = dma.vmem_to_hbm [thread:$0]  %s1186, 128, %s1184, %s1137, 64, 128, 4
        $region68: #{tpu_custom_call.1} parent=39 // pred_fallthru
          _
      $region40: #{tpu_custom_call.1} parent=5 // pred_fallthru
        _
      %p1192 = scmp.le.s32.totalorder 2, %s27
      // Predicated region
      $region69: #{tpu_custom_call.1} parent=5 // pred_check
        %p1193 = pneg %p1192
      $region70: #{tpu_custom_call.1} parent=5 // pred_check_branch
        %1195 = sbr.rel (%p1193) target = $region72
      $region71: #{tpu_custom_call.1} parent=5 // pred_region
        %s1196 = ssub.s32 %s27, 2
        // Predicated region
        $region73: #{tpu_custom_call.1} parent=71 // pred_check
          %p1197 = pneg %p192
        $region74: #{tpu_custom_call.1} parent=71 // pred_check_branch
          %1199 = sbr.rel (%p1197) target = $region76
        $region75: #{tpu_custom_call.1} parent=71 // pred_region
          %s1200 = sand.u32 %s177, 1
          %s1201 = scalar_lea.sflag [#allocation4], %s1200
          %s1202 = sand.u32 %s177, 1
          %s1203 = smul.addr %s1202, 16
          %s1204 = scalar_lea.vmem [#allocation10], %s1203
          %1205 = dma.done %s1201, 256
        $region76: #{tpu_custom_call.1} parent=71 // pred_fallthru
          _
        // Predicated region
        $region77: #{tpu_custom_call.1} parent=71 // pred_check
          %p1206 = pneg %p220
        $region78: #{tpu_custom_call.1} parent=71 // pred_check_branch
          %1208 = sbr.rel (%p1206) target = $region80
        $region79: #{tpu_custom_call.1} parent=71 // pred_region
          %s1209 = sand.u32 %s33, 1
          %s1210 = scalar_lea.sflag [#allocation12], %s1209
          %s1211 = sand.u32 %s205, 1
          %s1212 = smul.addr %s1211, 8
          %s1213 = scalar_lea.vmem [#allocation11], %s1212
          %1214 = dma.done %s1210, 128
        $region80: #{tpu_custom_call.1} parent=71 // pred_fallthru
          _
        // Predicated region
        $region81: #{tpu_custom_call.1} parent=71 // pred_check
          %p1215 = pneg %p248
        $region82: #{tpu_custom_call.1} parent=71 // pred_check_branch
          %1217 = sbr.rel (%p1215) target = $region84
        $region83: #{tpu_custom_call.1} parent=71 // pred_region
          %s1218 = sand.u32 %s33, 1
          %s1219 = scalar_lea.sflag [#allocation12], %s1218
          %s1220 = sand.u32 %s233, 1
          %s1221 = smul.addr %s1220, 8
          %s1222 = scalar_lea.vmem [#allocation13], %s1221
          %1223 = dma.done %s1219, 128
        $region84: #{tpu_custom_call.1} parent=71 // pred_fallthru
          _
      $region72: #{tpu_custom_call.1} parent=5 // pred_fallthru
        _
    $region6: #{tpu_custom_call.1} parent=1 // loop_footer
      %s31 = sadd.s32 1, %s27
    $region7: #{tpu_custom_call.1} parent=1 // loop_footer_branch
      %26 = sbr.rel target = $region3
    $region8: #{tpu_custom_call.1} parent=1 // loop_exit
      _
    %1224 = vsyncpa [#allocation3], 1
    %s1225 = scalar_lea.sflag [#allocation3], 1
    %1226 = vsyncpa %s1225, 1
    %1227 = vsyncpa [#allocation6], 1
    %s1228 = scalar_lea.sflag [#allocation6], 1
    %1229 = vsyncpa %s1228, 1
    %1230 = vsyncpa [#allocation9], 1
    %1231 = vsyncpa [#allocation4], 1
    %s1232 = scalar_lea.sflag [#allocation4], 1
    %1233 = vsyncpa %s1232, 1
    %1234 = vsyncpa [#allocation12], 1
    %s1235 = scalar_lea.sflag [#allocation12], 1
    %1236 = vsyncpa %s1235, 1

</llo_original>
